<compile_context>
chip_gen: v7x
topology: tpu7x:2x2x1
jax: 0.10.0
libtpu: 0.0.40
codegen_flags: <defaults>
</compile_context>

<pallas_src>
from functools import partial

import jax
import jax.numpy as jnp
from jax.experimental import pallas as pl
from jax.experimental.pallas import tpu as pltpu

BN_EPS = 1e-5
_LANE = 128


def conv_stats_kernel(xc_ref, w_ref, y_ref, ssum_ref, ssq_ref):
    """xc_ref  : (1, TH*W_out, KH*KW*Cin)  im2col patch tile
       w_ref   : (KH*KW*Cin, Cp)           flattened HWIO weights, Cout zero-padded
       y_ref   : (1, TH*W_out, Cp)         conv output tile (single store)
       ssum_ref: (1, 1, 1, Cp)             per-tile sum   (BN mean partial)
       ssq_ref : (1, 1, 1, Cp)             per-tile sumsq (BN var partial)
    """
    # One fat MXU matmul; accumulate in a local f32 value, store exactly once.
    acc = jax.lax.dot_general(
        xc_ref[0], w_ref[...],
        dimension_numbers=(((1,), (0,)), ((), ())),
        preferred_element_type=jnp.float32)
    y_ref[0] = acc

    # BN partials from the local accumulator (no re-read of the output block);
    # the axis-0 reductions go to the XLU slot, so they are nearly free here.
    ssum_ref[0, 0] = jnp.sum(acc, axis=0, keepdims=True)
    ssq_ref[0, 0] = jnp.sum(acc * acc, axis=0, keepdims=True)


def bn_relu6_kernel(y_ref, scale_ref, bias_ref, o_ref):
    """y_ref / o_ref: (1, TH*W_out, Cp); scale/bias: (1, 1, Cp)."""
    o_ref[...] = jnp.clip(
        y_ref[...] * scale_ref[...] + bias_ref[...], 0.0, 6.0
    ).astype(o_ref.dtype)


def _pick_tile_h(h_out, w_out, cp, kcin, budget_bytes=36 << 20):
    """Largest H tile whose per-step VMEM ledger (double-buffered im2col input
    tile + double-buffered output tile + weights) fits the budget and keeps the
    sublane dim a multiple of 8 (or equal to the full extent)."""
    kcin_pad = ((kcin + _LANE - 1) // _LANE) * _LANE   # lane padding of input tile

    def vmem_bytes(th):
        m = th * w_out
        return (2 * m * kcin_pad * 4       # input tile, double-buffered
                + 2 * m * cp * 4           # conv/output tile, double-buffered
                + 2 * kcin_pad * cp * 4)   # weights (counted double-buffered)

    valid = [th for th in range(1, h_out + 1)
             if h_out % th == 0 and (th == h_out or (th * w_out) % 8 == 0)]
    fitting = [th for th in valid if vmem_bytes(th) <= budget_bytes]
    return max(fitting) if fitting else min(valid)


@partial(jax.jit, static_argnames=("kernel_size", "padding", "tile_h"))
def conv_bn_relu6(x_nchw, weight_oihw, gamma, beta,
                  kernel_size=3, padding=None, tile_h=None):
    """Forward of ConvBNReLU. x: (N, Cin, H, W) NCHW -> (N, Cout, H_out, W_out).
    stride=1, groups=1 only (the module defaults)."""
    pad = (kernel_size - 1) // 2 if padding is None else padding
    N, Cin, H, W = x_nchw.shape
    Cout, _, KH, KW = weight_oihw.shape
    Hp, Wp = H + 2 * pad, W + 2 * pad
    H_out, W_out = Hp - KH + 1, Wp - KW + 1
    Cp = ((Cout + _LANE - 1) // _LANE) * _LANE          # lane-dense channel slab
    KCin = KH * KW * Cin                                # dense MXU contraction dim

    TH = _pick_tile_h(H_out, W_out, Cp, KCin) if tile_h is None else tile_h
    assert H_out % TH == 0 and (TH == H_out or (TH * W_out) % 8 == 0)
    nH = H_out // TH

    # ---- layout glue (plain JAX, fused by XLA around the pallas calls) ----
    x = jnp.transpose(x_nchw, (0, 2, 3, 1)).astype(jnp.float32)         # NHWC
    x_pad = jnp.pad(x, ((0, 0), (pad, pad), (pad, pad), (0, 0)))
    # Pre-im2col: (N, H_out, W_out, KH*KW*Cin), index order (kh, kw, cin).
    patches = [x_pad[:, kh:kh + H_out, kw:kw + W_out, :]
               for kh in range(KH) for kw in range(KW)]
    x_col = jnp.concatenate(patches, axis=-1).reshape(N, H_out * W_out, KCin)

    # Weights OIHW -> (KH, KW, Cin, Cout) -> (KH*KW*Cin, Cp) with zero-padded lanes.
    w = jnp.transpose(weight_oihw, (2, 3, 1, 0)).astype(jnp.float32)
    w = w.reshape(KCin, Cout)
    w = jnp.pad(w, ((0, 0), (0, Cp - Cout)))
    g = jnp.pad(gamma.astype(jnp.float32), (0, Cp - Cout))              # (Cp,)
    b = jnp.pad(beta.astype(jnp.float32), (0, Cp - Cout))

    cparams = pltpu.CompilerParams(
        dimension_semantics=("parallel", "parallel"),    # sharded over 2 TCs on v7x
        vmem_limit_bytes=48 * 1024 * 1024,               # < v7x 64 MiB physical
    )

    # ---- pass 1: conv (single matmul/tile) + per-tile BN partial sums ----
    conv_out, psum, psq = pl.pallas_call(
        conv_stats_kernel,
        grid=(N, nH),
        in_specs=[
            pl.BlockSpec((1, TH * W_out, KCin), lambda n, h: (n, h, 0)),
            pl.BlockSpec((KCin, Cp), lambda n, h: (0, 0)),
        ],
        out_specs=[
            pl.BlockSpec((1, TH * W_out, Cp), lambda n, h: (n, h, 0)),
            pl.BlockSpec((1, 1, 1, Cp), lambda n, h: (n, h, 0, 0)),
            pl.BlockSpec((1, 1, 1, Cp), lambda n, h: (n, h, 0, 0)),
        ],
        out_shape=(
            jax.ShapeDtypeStruct((N, H_out * W_out, Cp), jnp.float32),
            jax.ShapeDtypeStruct((N, nH, 1, Cp), jnp.float32),
            jax.ShapeDtypeStruct((N, nH, 1, Cp), jnp.float32),
        ),
        compiler_params=cparams,
    )(x_col, w)

    # ---- BN batch statistics (tiny O(Cp) math; biased variance, train mode) ----
    # NOTE: E[x^2]-mean^2 in f32 is adequate at these scales; Welford/two-pass
    # would be safer if the intermediate ever moves to bf16.
    count = jnp.float32(N * H_out * W_out)
    mean = jnp.sum(psum, axis=(0, 1, 2)) / count
    var = jnp.maximum(jnp.sum(psq, axis=(0, 1, 2)) / count - mean * mean, 0.0)
    scale = g * jax.lax.rsqrt(var + BN_EPS)
    bias = b - mean * scale

    # ---- pass 2: normalize + ReLU6, written in place over conv_out ----
    y = pl.pallas_call(
        bn_relu6_kernel,
        grid=(N, nH),
        in_specs=[
            pl.BlockSpec((1, TH * W_out, Cp), lambda n, h: (n, h, 0)),
            pl.BlockSpec((1, 1, Cp), lambda n, h: (0, 0, 0)),
            pl.BlockSpec((1, 1, Cp), lambda n, h: (0, 0, 0)),
        ],
        out_specs=pl.BlockSpec((1, TH * W_out, Cp), lambda n, h: (n, h, 0)),
        out_shape=jax.ShapeDtypeStruct((N, H_out * W_out, Cp), jnp.float32),
        input_output_aliases={0: 0},
        compiler_params=cparams,
    )(conv_out, scale.reshape(1, 1, Cp), bias.reshape(1, 1, Cp))

    # Single fused slice+transpose back to NCHW (padded lanes are exact zeros).
    y = jnp.transpose(y.reshape(N, H_out, W_out, Cp), (0, 3, 1, 2))[:, :Cout]
    return y


def reference(x_nchw, weight_oihw, gamma, beta, pad=1):
    """Pure-JAX reference (lax conv + BN(train) + ReLU6) for sanity checking."""
    y = jax.lax.conv_general_dilated(
        x_nchw.astype(jnp.float32), weight_oihw.astype(jnp.float32),
        window_strides=(1, 1), padding=[(pad, pad), (pad, pad)],
        dimension_numbers=("NCHW", "OIHW", "NCHW"))
    mean = jnp.mean(y, axis=(0, 2, 3), keepdims=True)
    var = jnp.mean((y - mean) ** 2, axis=(0, 2, 3), keepdims=True)
    y = (y - mean) * (gamma.reshape(1, -1, 1, 1) * jax.lax.rsqrt(var + BN_EPS)) \
        + beta.reshape(1, -1, 1, 1)
    return jnp.clip(y, 0.0, 6.0)


if __name__ == "__main__":
    # Small shapes consistent with the module: N=2, Cin=4, Cout=8, H=W=16, k=3.
    N, Cin, Cout, H, W, K = 2, 4, 8, 16, 16, 3
    key = jax.random.PRNGKey(0)
    kx, kw, kg, kb = jax.random.split(key, 4)

    x = jax.random.normal(kx, (N, Cin, H, W), dtype=jnp.float32)
    # Deterministic parameter init (synthetic, not a checkpoint load).
    weight = 0.1 * jax.random.normal(kw, (Cout, Cin, K, K), dtype=jnp.float32)
    gamma = 1.0 + 0.1 * jax.random.normal(kg, (Cout,), dtype=jnp.float32)
    beta = 0.1 * jax.random.normal(kb, (Cout,), dtype=jnp.float32)

    # tile_h=8 -> grid (N=2, nH=2): exercises the pipelined multi-tile path.
    out = conv_bn_relu6(x, weight, gamma, beta, tile_h=8)
    out = jax.block_until_ready(out)

    ref = jax.block_until_ready(reference(x, weight, gamma, beta))
    assert out.shape == (N, Cout, H, W)
    assert jnp.allclose(out, ref, atol=1e-3, rtol=1e-3), \
        float(jnp.max(jnp.abs(out - ref)))

    print("KERNEL_OK")
</pallas_src>

<mosaic_0001>
module attributes {stable_mosaic.version = 11 : i64} {
  func.func @conv_stats_kernel(%arg0: i32, %arg1: i32, %arg2: memref<1x128x36xf32, #tpu.memory_space<vmem>>, %arg3: memref<36x128xf32, #tpu.memory_space<vmem>>, %arg4: memref<1x128x128xf32, #tpu.memory_space<vmem>>, %arg5: memref<1x1x1x128xf32, #tpu.memory_space<vmem>>, %arg6: memref<1x1x1x128xf32, #tpu.memory_space<vmem>>) attributes {dimension_semantics = [#tpu.dimension_semantics<parallel>, #tpu.dimension_semantics<parallel>], iteration_bounds = array<i64: 2, 2>, scalar_prefetch = 0 : i64, scratch_operands = 0 : i64, tpu.core_type = #tpu.core_type<tc>, window_params = [{transform_indices = @transform_0, window_bounds = array<i64: 1, 128, 36>}, {pipeline_mode = #tpu.pipeline_mode<synchronous>, transform_indices = @transform_1, window_bounds = array<i64: 36, 128>}, {transform_indices = @transform_2, window_bounds = array<i64: 1, 128, 128>}, {transform_indices = @transform_3, window_bounds = array<i64: 1, 1, 1, 128>}, {transform_indices = @transform_4, window_bounds = array<i64: 1, 1, 1, 128>}]} {
    %c0 = arith.constant 0 : index
    %c0_0 = arith.constant 0 : index
    %c0_1 = arith.constant 0 : index
    %0 = vector.load %arg2[%c0, %c0_0, %c0_1] : memref<1x128x36xf32, #tpu.memory_space<vmem>>, vector<1x128x36xf32>
    %1 = vector.shape_cast %0 : vector<1x128x36xf32> to vector<128x36xf32>
    %c0_2 = arith.constant 0 : index
    %c0_3 = arith.constant 0 : index
    %2 = vector.load %arg3[%c0_2, %c0_3] : memref<36x128xf32, #tpu.memory_space<vmem>>, vector<36x128xf32>
    %cst = arith.constant dense<0.000000e+00> : vector<128x128xf32>
    %3 = tpu.matmul %1, %2, %cst {dimension_numbers = #tpu.dot_dimension_numbers<[1], [0], [0], [1], [0, 0, 1, 1], [], []>} : vector<128x36xf32>, vector<36x128xf32>, vector<128x128xf32> -> vector<128x128xf32>
    %c0_4 = arith.constant 0 : index
    %c0_5 = arith.constant 0 : index
    %c0_6 = arith.constant 0 : index
    %4 = vector.load %arg4[%c0_4, %c0_5, %c0_6] : memref<1x128x128xf32, #tpu.memory_space<vmem>>, vector<1x128x128xf32>
    %5 = vector.shape_cast %4 : vector<1x128x128xf32> to vector<128x128xf32>
    %6 = vector.shape_cast %3 : vector<128x128xf32> to vector<1x128x128xf32>
    tpu.vector_store %arg4[%c0_4, %c0_5, %c0_6], %6 {strides = array<i32>} : memref<1x128x128xf32, #tpu.memory_space<vmem>>, vector<1x128x128xf32>,
    %cst_7 = arith.constant dense<0.000000e+00> : vector<128xf32>
    %7 = vector.multi_reduction <add>, %3, %cst_7 [0] : vector<128x128xf32> to vector<128xf32>
    %8 = vector.shape_cast %7 : vector<128xf32> to vector<1x128xf32>
    %c0_8 = arith.constant 0 : index
    %c0_9 = arith.constant 0 : index
    %c0_10 = arith.constant 0 : index
    %c0_11 = arith.constant 0 : index
    %9 = vector.load %arg5[%c0_8, %c0_9, %c0_10, %c0_11] : memref<1x1x1x128xf32, #tpu.memory_space<vmem>>, vector<1x1x1x128xf32>
    %10 = vector.shape_cast %9 : vector<1x1x1x128xf32> to vector<1x128xf32>
    %11 = vector.shape_cast %8 : vector<1x128xf32> to vector<1x1x1x128xf32>
    tpu.vector_store %arg5[%c0_8, %c0_9, %c0_10, %c0_11], %11 {strides = array<i32>} : memref<1x1x1x128xf32, #tpu.memory_space<vmem>>, vector<1x1x1x128xf32>,
    %12 = arith.mulf %3, %3 : vector<128x128xf32>
    %cst_12 = arith.constant dense<0.000000e+00> : vector<128xf32>
    %13 = vector.multi_reduction <add>, %12, %cst_12 [0] : vector<128x128xf32> to vector<128xf32>
    %14 = vector.shape_cast %13 : vector<128xf32> to vector<1x128xf32>
    %c0_13 = arith.constant 0 : index
    %c0_14 = arith.constant 0 : index
    %c0_15 = arith.constant 0 : index
    %c0_16 = arith.constant 0 : index
    %15 = vector.load %arg6[%c0_13, %c0_14, %c0_15, %c0_16] : memref<1x1x1x128xf32, #tpu.memory_space<vmem>>, vector<1x1x1x128xf32>
    %16 = vector.shape_cast %15 : vector<1x1x1x128xf32> to vector<1x128xf32>
    %17 = vector.shape_cast %14 : vector<1x128xf32> to vector<1x1x1x128xf32>
    tpu.vector_store %arg6[%c0_13, %c0_14, %c0_15, %c0_16], %17 {strides = array<i32>} : memref<1x1x1x128xf32, #tpu.memory_space<vmem>>, vector<1x1x1x128xf32>,
    return
  }
  func.func @transform_0(%arg0: i32, %arg1: i32) -> (i32, i32, i32) {
    %c0_i32 = arith.constant 0 : i32
    %c0_i32_0 = arith.constant 0 : i32
    return %arg0, %arg1, %c0_i32 : i32, i32, i32
  }
  func.func @transform_1(%arg0: i32, %arg1: i32) -> (i32, i32) {
    %c0_i32 = arith.constant 0 : i32
    %c0_i32_0 = arith.constant 0 : i32
    %c0_i32_1 = arith.constant 0 : i32
    return %c0_i32, %c0_i32_0 : i32, i32
  }
  func.func @transform_2(%arg0: i32, %arg1: i32) -> (i32, i32, i32) {
    %c0_i32 = arith.constant 0 : i32
    %c0_i32_0 = arith.constant 0 : i32
    return %arg0, %arg1, %c0_i32 : i32, i32, i32
  }
  func.func @transform_3(%arg0: i32, %arg1: i32) -> (i32, i32, i32, i32) {
    %c0_i32 = arith.constant 0 : i32
    %c0_i32_0 = arith.constant 0 : i32
    %c0_i32_1 = arith.constant 0 : i32
    return %arg0, %arg1, %c0_i32, %c0_i32_0 : i32, i32, i32, i32
  }
  func.func @transform_4(%arg0: i32, %arg1: i32) -> (i32, i32, i32, i32) {
    %c0_i32 = arith.constant 0 : i32
    %c0_i32_0 = arith.constant 0 : i32
    %c0_i32_1 = arith.constant 0 : i32
    return %arg0, %arg1, %c0_i32, %c0_i32_0 : i32, i32, i32, i32
  }
}

module attributes {stable_mosaic.version = 11 : i64} {
  func.func @bn_relu6_kernel(%arg0: i32, %arg1: i32, %arg2: memref<1x128x128xf32, #tpu.memory_space<vmem>>, %arg3: memref<1x1x128xf32, #tpu.memory_space<vmem>>, %arg4: memref<1x1x128xf32, #tpu.memory_space<vmem>>, %arg5: memref<1x128x128xf32, #tpu.memory_space<vmem>>) attributes {dimension_semantics = [#tpu.dimension_semantics<parallel>, #tpu.dimension_semantics<parallel>], iteration_bounds = array<i64: 2, 2>, scalar_prefetch = 0 : i64, scratch_operands = 0 : i64, tpu.core_type = #tpu.core_type<tc>, window_params = [{transform_indices = @transform_0, window_bounds = array<i64: 1, 128, 128>}, {pipeline_mode = #tpu.pipeline_mode<synchronous>, transform_indices = @transform_1, window_bounds = array<i64: 1, 1, 128>}, {pipeline_mode = #tpu.pipeline_mode<synchronous>, transform_indices = @transform_2, window_bounds = array<i64: 1, 1, 128>}, {transform_indices = @transform_3, window_bounds = array<i64: 1, 128, 128>}]} {
    %c0 = arith.constant 0 : index
    %c0_0 = arith.constant 0 : index
    %c0_1 = arith.constant 0 : index
    %0 = vector.load %arg2[%c0, %c0_0, %c0_1] : memref<1x128x128xf32, #tpu.memory_space<vmem>>, vector<1x128x128xf32>
    %c0_2 = arith.constant 0 : index
    %c0_3 = arith.constant 0 : index
    %c0_4 = arith.constant 0 : index
    %1 = vector.load %arg3[%c0_2, %c0_3, %c0_4] : memref<1x1x128xf32, #tpu.memory_space<vmem>>, vector<1x1x128xf32>
    %2 = vector.broadcast %1 : vector<1x1x128xf32> to vector<1x128x128xf32>
    %3 = arith.mulf %0, %2 : vector<1x128x128xf32>
    %c0_5 = arith.constant 0 : index
    %c0_6 = arith.constant 0 : index
    %c0_7 = arith.constant 0 : index
    %4 = vector.load %arg4[%c0_5, %c0_6, %c0_7] : memref<1x1x128xf32, #tpu.memory_space<vmem>>, vector<1x1x128xf32>
    %5 = vector.broadcast %4 : vector<1x1x128xf32> to vector<1x128x128xf32>
    %6 = arith.addf %3, %5 : vector<1x128x128xf32>
    %cst = arith.constant 0.000000e+00 : f32
    %cst_8 = arith.constant 6.000000e+00 : f32
    %7 = vector.broadcast %cst : f32 to vector<1x128x128xf32>
    %8 = arith.maximumf %7, %6 : vector<1x128x128xf32>
    %9 = vector.broadcast %cst_8 : f32 to vector<1x128x128xf32>
    %10 = arith.minimumf %9, %8 : vector<1x128x128xf32>
    %c0_9 = arith.constant 0 : index
    %c0_10 = arith.constant 0 : index
    %c0_11 = arith.constant 0 : index
    %11 = vector.load %arg5[%c0_9, %c0_10, %c0_11] : memref<1x128x128xf32, #tpu.memory_space<vmem>>, vector<1x128x128xf32>
    tpu.vector_store %arg5[%c0_9, %c0_10, %c0_11], %10 {strides = array<i32>} : memref<1x128x128xf32, #tpu.memory_space<vmem>>, vector<1x128x128xf32>,
    return
  }
  func.func @transform_0(%arg0: i32, %arg1: i32) -> (i32, i32, i32) {
    %c0_i32 = arith.constant 0 : i32
    %c0_i32_0 = arith.constant 0 : i32
    return %arg0, %arg1, %c0_i32 : i32, i32, i32
  }
  func.func @transform_1(%arg0: i32, %arg1: i32) -> (i32, i32, i32) {
    %c0_i32 = arith.constant 0 : i32
    %c0_i32_0 = arith.constant 0 : i32
    %c0_i32_1 = arith.constant 0 : i32
    %c0_i32_2 = arith.constant 0 : i32
    return %c0_i32, %c0_i32_0, %c0_i32_1 : i32, i32, i32
  }
  func.func @transform_2(%arg0: i32, %arg1: i32) -> (i32, i32, i32) {
    %c0_i32 = arith.constant 0 : i32
    %c0_i32_0 = arith.constant 0 : i32
    %c0_i32_1 = arith.constant 0 : i32
    %c0_i32_2 = arith.constant 0 : i32
    return %c0_i32, %c0_i32_0, %c0_i32_1 : i32, i32, i32
  }
  func.func @transform_3(%arg0: i32, %arg1: i32) -> (i32, i32, i32) {
    %c0_i32 = arith.constant 0 : i32
    %c0_i32_0 = arith.constant 0 : i32
    return %arg0, %arg1, %c0_i32 : i32, i32, i32
  }
}

</mosaic_0001>

<llo_original>
// kernel: conv_bn_relu6.3
$region0: #{conv_bn_relu6.3}
  #allocation0 [shape = 'u32[]', space=smem, size = 0x4, offset = 0x4, fixed_abs, tag = 'smem constant byte address 0x4 - core index']
  #allocation1 [shape = 'u32[144,128]{1,0:T(1,128)}', space=vmem, size = 0x12000, scoped, tag = 'internal scratch']
  %s0 = inlined_call_operand.vmem [shape: f32[2,256,128], index: 0, kind: input, shape index: {}, may-alias: {0,3}]
  %s1 = inlined_call_operand.vmem [shape: f32[1,1,128], index: 1, kind: input, shape index: {}]
  %s2 = inlined_call_operand.vmem [shape: f32[1,1,128], index: 2, kind: input, shape index: {}]
  %s3 = inlined_call_operand.vmem [shape: f32[2,256,128], index: 3, kind: output, shape index: {}, may-alias: {0,3}]
  %s4 = sld [smem:[#allocation0]]
  $region45: #{conv_bn_relu6.3} parent=0
    _
  %s6 = ssub.s32 1, %s4
  %s7 = scalar_select 0, %s6, %s4
  loop: start=0, step=1, limit=6
  $region2: #{conv_bn_relu6.3} parent=0 // loop_pre_header
    _
  $region3: #{conv_bn_relu6.3} parent=0 // loop_header
    %s9 = sphi 0, %s13
    %p10 = scmp.ge.s32.totalorder %s9, 6
    %s16 = sphi 0, %s28
    %s17 = sphi 0, %s24
    %s18 = sphi 0, %s16
    %s19 = sphi 0, %s17
    %s20 = sphi 0, %s18
    %s21 = sphi 0, %s19
    %s33 = sphi 0, %s35
    %s36 = sphi 0, %s33
    %s37 = sphi 0, %s36
    %s53 = sphi 0, %s37
    %s57 = sphi 0, %s57
    %s59 = sphi 0, %s57
    %s60 = sphi 0, %s59
    %s74 = sphi 0, %s60
    %s78 = sphi 0, %s78
    %s80 = sphi 0, %s78
    %s81 = sphi 0, %s80
    %s95 = sphi 0, %s81
    %s103 = sphi 0, %s105
    %s106 = sphi 0, %s103
    %s107 = sphi 0, %s106
    %s123 = sphi 0, %s107
  $region4: #{conv_bn_relu6.3} parent=0 // loop_header_branch
    %12 = sbr.rel (%p10) target = $region8
  $region5: #{conv_bn_relu6.3} parent=0 // loop_body
    %s14 = ssub.s32 %s9, 1
    %s15 = ssub.s32 %s9, 2
    %s22 = sadd.s32 1, %s17
    %p23 = scmp.ge.s32.totalorder %s22, 2
    %s24 = scalar_select %p23, 0, %s22
    %s25 = sadd.s32 1, %s16
    %s26 = scalar_select %p23, %s25, %s16
    %p27 = scmp.ge.s32.totalorder %s26, 2
    %s28 = scalar_select %p27, 0, %s26
    %s29 = ssub.s32 %s16, %s28
    %s30 = ssub.s32 %s17, %s24
    %s31 = sor.u32 %s29, %s30
    %p32 = scmp.eq.s32.totalorder %s31, 0
    %s34 = sadd.s32 %s33, 1
    %s35 = scalar_select %p32, %s33, %s34
    %p38 = pneg %p32
    %p39 = scmp.eq.s32.totalorder %s9, 3
    %p40 = por %p38, %p39
    %p41 = scmp.ne.s32.totalorder %s33, %s36
    %p42 = scmp.eq.s32.totalorder %s9, 0
    %p43 = por %p41, %p42
    %p44 = scmp.ne.s32.totalorder %s33, %s36
    %p45 = scmp.eq.s32.totalorder %s14, 3
    %p46 = por %p44, %p45
    %p47 = scmp.ne.s32.totalorder %s36, %s37
    %p48 = scmp.eq.s32.totalorder %s14, 0
    %p49 = por %p47, %p48
    %p50 = scmp.ne.s32.totalorder %s36, %s37
    %p51 = scmp.eq.s32.totalorder %s15, 3
    %p52 = por %p50, %p51
    %p54 = scmp.ne.s32.totalorder %s37, %s53
    %p55 = scmp.eq.s32.totalorder %s15, 0
    %p56 = por %p54, %p55
    %s58 = sadd.s32 %s57, 1
    %p61 = scmp.eq.s32.totalorder %s9, 3
    %p62 = scmp.ne.s32.totalorder %s57, %s59
    %p63 = scmp.eq.s32.totalorder %s9, 0
    %p64 = por %p62, %p63
    %p65 = scmp.ne.s32.totalorder %s57, %s59
    %p66 = scmp.eq.s32.totalorder %s14, 3
    %p67 = por %p65, %p66
    %p68 = scmp.ne.s32.totalorder %s59, %s60
    %p69 = scmp.eq.s32.totalorder %s14, 0
    %p70 = por %p68, %p69
    %p71 = scmp.ne.s32.totalorder %s59, %s60
    %p72 = scmp.eq.s32.totalorder %s15, 3
    %p73 = por %p71, %p72
    %p75 = scmp.ne.s32.totalorder %s60, %s74
    %p76 = scmp.eq.s32.totalorder %s15, 0
    %p77 = por %p75, %p76
    %s79 = sadd.s32 %s78, 1
    %p82 = scmp.eq.s32.totalorder %s9, 3
    %p83 = scmp.ne.s32.totalorder %s78, %s80
    %p84 = scmp.eq.s32.totalorder %s9, 0
    %p85 = por %p83, %p84
    %p86 = scmp.ne.s32.totalorder %s78, %s80
    %p87 = scmp.eq.s32.totalorder %s14, 3
    %p88 = por %p86, %p87
    %p89 = scmp.ne.s32.totalorder %s80, %s81
    %p90 = scmp.eq.s32.totalorder %s14, 0
    %p91 = por %p89, %p90
    %p92 = scmp.ne.s32.totalorder %s80, %s81
    %p93 = scmp.eq.s32.totalorder %s15, 3
    %p94 = por %p92, %p93
    %p96 = scmp.ne.s32.totalorder %s81, %s95
    %p97 = scmp.eq.s32.totalorder %s15, 0
    %p98 = por %p96, %p97
    %s99 = ssub.s32 %s16, %s28
    %s100 = ssub.s32 %s17, %s24
    %s101 = sor.u32 %s99, %s100
    %p102 = scmp.eq.s32.totalorder %s101, 0
    %s104 = sadd.s32 %s103, 1
    %s105 = scalar_select %p102, %s103, %s104
    %p108 = pneg %p102
    %p109 = scmp.eq.s32.totalorder %s9, 3
    %p110 = por %p108, %p109
    %p111 = scmp.ne.s32.totalorder %s103, %s106
    %p112 = scmp.eq.s32.totalorder %s9, 0
    %p113 = por %p111, %p112
    %p114 = scmp.ne.s32.totalorder %s103, %s106
    %p115 = scmp.eq.s32.totalorder %s14, 3
    %p116 = por %p114, %p115
    %p117 = scmp.ne.s32.totalorder %s106, %s107
    %p118 = scmp.eq.s32.totalorder %s14, 0
    %p119 = por %p117, %p118
    %p120 = scmp.ne.s32.totalorder %s106, %s107
    %p121 = scmp.eq.s32.totalorder %s15, 3
    %p122 = por %p120, %p121
    %p124 = scmp.ne.s32.totalorder %s107, %s123
    %p125 = scmp.eq.s32.totalorder %s15, 0
    %p126 = por %p124, %p125
    %p127 = scmp.le.s32.totalorder 1, %s9
    %p128 = scmp.lt.s32.totalorder %s9, 5
    %p129 = pnand %p127, %p128
    %p130 = pneg %p129
    // Predicated region
    $region9: #{conv_bn_relu6.3} parent=5 // pred_check
      _
    $region10: #{conv_bn_relu6.3} parent=5 // pred_check_branch
      %132 = sbr.rel (%p129) target = $region12
    $region11: #{conv_bn_relu6.3} parent=5 // pred_region
      %s133 = ssub.s32 %s9, 1
      // Predicated region
      $region13: #{conv_bn_relu6.3} parent=11 // pred_check
        %p134 = pneg %p70
      $region14: #{conv_bn_relu6.3} parent=11 // pred_check_branch
        %136 = sbr.rel (%p134) target = $region16
      $region15: #{conv_bn_relu6.3} parent=11 // pred_region
        _
      $region16: #{conv_bn_relu6.3} parent=11 // pred_fallthru
        _
      // Predicated region
      $region17: #{conv_bn_relu6.3} parent=11 // pred_check
        %p137 = pneg %p91
      $region18: #{conv_bn_relu6.3} parent=11 // pred_check_branch
        %139 = sbr.rel (%p137) target = $region20
      $region19: #{conv_bn_relu6.3} parent=11 // pred_region
        _
      $region20: #{conv_bn_relu6.3} parent=11 // pred_fallthru
        _
    $region12: #{conv_bn_relu6.3} parent=5 // pred_fallthru
      _
    %p140 = scmp.lt.s32.totalorder %s9, 4
    // Predicated region
    $region21: #{conv_bn_relu6.3} parent=5 // pred_check
      %p141 = pneg %p140
    $region22: #{conv_bn_relu6.3} parent=5 // pred_check_branch
      %143 = sbr.rel (%p141) target = $region24
    $region23: #{conv_bn_relu6.3} parent=5 // pred_region
      // Predicated region
      $region25: #{conv_bn_relu6.3} parent=23 // pred_check
        %p144 = pneg %p43
      $region26: #{conv_bn_relu6.3} parent=23 // pred_check_branch
        %146 = sbr.rel (%p144) target = $region28
      $region27: #{conv_bn_relu6.3} parent=23 // pred_region
        %s147 = smul.u32 16, %s17
        %p148 = scmp.lt.s32.totalorder %s16, 1
        %s149 = scalar_select %p148, %s16, 1
        %p150 = scmp.lt.s32.totalorder %s147, 31
        %s151 = scalar_select %p150, %s147, 31
        %s152 = smul.addr %s149, 32
        %s153 = sadd.s32 %s151, %s152
        %s154 = smul.addr %s153, 8
        %s155 = scalar_lea.vmem %s0, %s154
        %s156 = smul.u32 16, %s17
      $region28: #{conv_bn_relu6.3} parent=23 // pred_fallthru
        _
    $region24: #{conv_bn_relu6.3} parent=5 // pred_fallthru
      _
    %p157 = scmp.le.s32.totalorder 1, %s9
    %p158 = scmp.lt.s32.totalorder %s9, 5
    %p159 = pnand %p157, %p158
    %p160 = pneg %p159
    // Predicated region
    $region29: #{conv_bn_relu6.3} parent=5 // pred_check
      _
    $region30: #{conv_bn_relu6.3} parent=5 // pred_check_branch
      %162 = sbr.rel (%p159) target = $region32
    $region31: #{conv_bn_relu6.3} parent=5 // pred_region
      %s163 = ssub.s32 %s9, 1
      %s164 = smul.u32 16, %s19
      %p165 = scmp.lt.s32.totalorder %s18, 1
      %s166 = scalar_select %p165, %s18, 1
      %p167 = scmp.lt.s32.totalorder %s164, 31
      %s168 = scalar_select %p167, %s164, 31
      %s169 = smul.addr %s166, 32
      %s170 = sadd.s32 %s168, %s169
      %s171 = smul.addr %s170, 8
      %s172 = scalar_lea.vmem %s0, %s171
      %p173 = pneg %p49
      %p174 = pneg %p46
      %p175 = pneg %p70
      %p176 = pneg %p67
      %p177 = pneg %p91
      %p178 = pneg %p88
      %p179 = pneg %p119
      %p180 = pneg %p116
      %s181 = smul.u32 16, %s19
      %p182 = scmp.lt.s32.totalorder %s18, 1
      %s183 = scalar_select %p182, %s18, 1
      %p184 = scmp.lt.s32.totalorder %s181, 31
      %s185 = scalar_select %p184, %s181, 31
      %s186 = smul.addr %s183, 32
      %s187 = sadd.s32 %s185, %s186
      %s188 = smul.addr %s187, 8
      %s189 = scalar_lea.vmem %s3, %s188
      %s190 = smul.u32 16, %s19
      %p191 = scmp.lt.s32.totalorder %s18, 1
      %s192 = scalar_select %p191, %s18, 1
      %p193 = scmp.lt.s32.totalorder %s190, 31
      %s194 = scalar_select %p193, %s190, 31
      %s195 = smul.addr %s192, 32
      %s196 = sadd.s32 %s194, %s195
      %s197 = smul.addr %s196, 8
      %s198 = scalar_lea.vmem %s0, %s197
      %s199 = smul.u32 16, %s19
      %s200 = smul.u32 16, %s19
      %p201 = scmp.lt.s32.totalorder %s18, 1
      %s202 = scalar_select %p201, %s18, 1
      %p203 = scmp.lt.s32.totalorder %s200, 31
      %s204 = scalar_select %p203, %s200, 31
      %s205 = smul.addr %s202, 32
      %s206 = sadd.s32 %s204, %s205
      %s207 = smul.addr %s206, 8
      %s208 = scalar_lea.vmem %s3, %s207
      %s209 = smul.u32 16, %s19
      %v210 = vld [vmem:[%s198] sm:$0xff]
      %v211 = vld [vmem:[%s198 + $0x8] sm:$0xff]
      %v212 = vld [vmem:[%s198 + $0x10] sm:$0xff]
      %v213 = vld [vmem:[%s198 + $0x18] sm:$0xff]
      %v214 = vld [vmem:[%s198 + $0x20] sm:$0xff]
      %v215 = vld [vmem:[%s198 + $0x28] sm:$0xff]
      %v216 = vld [vmem:[%s198 + $0x30] sm:$0xff]
      %v217 = vld [vmem:[%s198 + $0x38] sm:$0xff]
      %v218 = vld [vmem:[%s198 + $0x40] sm:$0xff]
      %v219 = vld [vmem:[%s198 + $0x48] sm:$0xff]
      %v220 = vld [vmem:[%s198 + $0x50] sm:$0xff]
      %v221 = vld [vmem:[%s198 + $0x58] sm:$0xff]
      %v222 = vld [vmem:[%s198 + $0x60] sm:$0xff]
      %v223 = vld [vmem:[%s198 + $0x68] sm:$0xff]
      %v224 = vld [vmem:[%s198 + $0x70] sm:$0xff]
      %v225 = vld [vmem:[%s198 + $0x78] sm:$0xff]
      %v226 = vld [vmem:[%s1] sm:$0x1]
      %v228 = vlaneseq
      %v229 = vshrl.u32 %v228, 7
      %v230 = vsub.s32 0, %v229
      %v231 = vrot.slane %v226, %v230
      %v233 = vmul.f32 %v210, %v231
      %v234 = vmul.f32 %v211, %v231
      %v235 = vmul.f32 %v212, %v231
      %v236 = vmul.f32 %v213, %v231
      %v237 = vmul.f32 %v214, %v231
      %v238 = vmul.f32 %v215, %v231
      %v239 = vmul.f32 %v216, %v231
      %v240 = vmul.f32 %v217, %v231
      %v241 = vmul.f32 %v218, %v231
      %v242 = vmul.f32 %v219, %v231
      %v243 = vmul.f32 %v220, %v231
      %v244 = vmul.f32 %v221, %v231
      %v245 = vmul.f32 %v222, %v231
      %v246 = vmul.f32 %v223, %v231
      %v247 = vmul.f32 %v224, %v231
      %v248 = vmul.f32 %v225, %v231
      %v249 = vld [vmem:[%s2] sm:$0x1]
      %v251 = vlaneseq
      %v252 = vshrl.u32 %v251, 7
      %v253 = vsub.s32 0, %v252
      %v254 = vrot.slane %v249, %v253
      %v256 = vadd.f32 %v233, %v254
      %v257 = vadd.f32 %v234, %v254
      %v258 = vadd.f32 %v235, %v254
      %v259 = vadd.f32 %v236, %v254
      %v260 = vadd.f32 %v237, %v254
      %v261 = vadd.f32 %v238, %v254
      %v262 = vadd.f32 %v239, %v254
      %v263 = vadd.f32 %v240, %v254
      %v264 = vadd.f32 %v241, %v254
      %v265 = vadd.f32 %v242, %v254
      %v266 = vadd.f32 %v243, %v254
      %v267 = vadd.f32 %v244, %v254
      %v268 = vadd.f32 %v245, %v254
      %v269 = vadd.f32 %v246, %v254
      %v270 = vadd.f32 %v247, %v254
      %v271 = vadd.f32 %v248, %v254
      %v272 = vmax.f32 %v256, 0.0
      %v273 = vmax.f32 %v257, 0.0
      %v274 = vmax.f32 %v258, 0.0
      %v275 = vmax.f32 %v259, 0.0
      %v276 = vmax.f32 %v260, 0.0
      %v277 = vmax.f32 %v261, 0.0
      %v278 = vmax.f32 %v262, 0.0
      %v279 = vmax.f32 %v263, 0.0
      %v280 = vmax.f32 %v264, 0.0
      %v281 = vmax.f32 %v265, 0.0
      %v282 = vmax.f32 %v266, 0.0
      %v283 = vmax.f32 %v267, 0.0
      %v284 = vmax.f32 %v268, 0.0
      %v285 = vmax.f32 %v269, 0.0
      %v286 = vmax.f32 %v270, 0.0
      %v287 = vmax.f32 %v271, 0.0
      %v288 = vmin.f32 %v272, 6.0
      %v289 = vmin.f32 %v273, 6.0
      %v290 = vmin.f32 %v274, 6.0
      %v291 = vmin.f32 %v275, 6.0
      %v292 = vmin.f32 %v276, 6.0
      %v293 = vmin.f32 %v277, 6.0
      %v294 = vmin.f32 %v278, 6.0
      %v295 = vmin.f32 %v279, 6.0
      %v296 = vmin.f32 %v280, 6.0
      %v297 = vmin.f32 %v281, 6.0
      %v298 = vmin.f32 %v282, 6.0
      %v299 = vmin.f32 %v283, 6.0
      %v300 = vmin.f32 %v284, 6.0
      %v301 = vmin.f32 %v285, 6.0
      %v302 = vmin.f32 %v286, 6.0
      %v303 = vmin.f32 %v287, 6.0
      %304 = vst [vmem:[%s208] sm:$0xff] %v288
      %305 = vst [vmem:[%s208 + $0x8] sm:$0xff] %v289
      %306 = vst [vmem:[%s208 + $0x10] sm:$0xff] %v290
      %307 = vst [vmem:[%s208 + $0x18] sm:$0xff] %v291
      %308 = vst [vmem:[%s208 + $0x20] sm:$0xff] %v292
      %309 = vst [vmem:[%s208 + $0x28] sm:$0xff] %v293
      %310 = vst [vmem:[%s208 + $0x30] sm:$0xff] %v294
      %311 = vst [vmem:[%s208 + $0x38] sm:$0xff] %v295
      %312 = vst [vmem:[%s208 + $0x40] sm:$0xff] %v296
      %313 = vst [vmem:[%s208 + $0x48] sm:$0xff] %v297
      %314 = vst [vmem:[%s208 + $0x50] sm:$0xff] %v298
      %315 = vst [vmem:[%s208 + $0x58] sm:$0xff] %v299
      %316 = vst [vmem:[%s208 + $0x60] sm:$0xff] %v300
      %317 = vst [vmem:[%s208 + $0x68] sm:$0xff] %v301
      %318 = vst [vmem:[%s208 + $0x70] sm:$0xff] %v302
      %319 = vst [vmem:[%s208 + $0x78] sm:$0xff] %v303
      %s320 = smul.u32 16, %s19
      %p321 = scmp.lt.s32.totalorder %s18, 1
      %s322 = scalar_select %p321, %s18, 1
      %p323 = scmp.lt.s32.totalorder %s320, 31
      %s324 = scalar_select %p323, %s320, 31
      %s325 = smul.addr %s322, 32
      %s326 = sadd.s32 %s324, %s325
      %s327 = smul.addr %s326, 8
      %s328 = scalar_lea.vmem %s3, %s327
      // Predicated region
      $region33: #{conv_bn_relu6.3} parent=31 // pred_check
        %p329 = pneg %p116
      $region34: #{conv_bn_relu6.3} parent=31 // pred_check_branch
        %331 = sbr.rel (%p329) target = $region36
      $region35: #{conv_bn_relu6.3} parent=31 // pred_region
        %s332 = smul.u32 16, %s19
      $region36: #{conv_bn_relu6.3} parent=31 // pred_fallthru
        _
    $region32: #{conv_bn_relu6.3} parent=5 // pred_fallthru
      _
    %p333 = scmp.le.s32.totalorder 2, %s9
    // Predicated region
    $region37: #{conv_bn_relu6.3} parent=5 // pred_check
      %p334 = pneg %p333
    $region38: #{conv_bn_relu6.3} parent=5 // pred_check_branch
      %336 = sbr.rel (%p334) target = $region40
    $region39: #{conv_bn_relu6.3} parent=5 // pred_region
      %s337 = ssub.s32 %s9, 2
      // Predicated region
      $region41: #{conv_bn_relu6.3} parent=39 // pred_check
        %p338 = pneg %p122
      $region42: #{conv_bn_relu6.3} parent=39 // pred_check_branch
        %340 = sbr.rel (%p338) target = $region44
      $region43: #{conv_bn_relu6.3} parent=39 // pred_region
        %s341 = smul.u32 16, %s21
        %p342 = scmp.lt.s32.totalorder %s20, 1
        %s343 = scalar_select %p342, %s20, 1
        %p344 = scmp.lt.s32.totalorder %s341, 31
        %s345 = scalar_select %p344, %s341, 31
        %s346 = smul.addr %s343, 32
        %s347 = sadd.s32 %s345, %s346
        %s348 = smul.addr %s347, 8
        %s349 = scalar_lea.vmem %s3, %s348
      $region44: #{conv_bn_relu6.3} parent=39 // pred_fallthru
        _
    $region40: #{conv_bn_relu6.3} parent=5 // pred_fallthru
      _
  $region6: #{conv_bn_relu6.3} parent=0 // loop_footer
    %s13 = sadd.s32 1, %s9
  $region7: #{conv_bn_relu6.3} parent=0 // loop_footer_branch
    %8 = sbr.rel target = $region3
  $region8: #{conv_bn_relu6.3} parent=0 // loop_exit
    _

// kernel: conv_bn_relu6.2
$region0: #{conv_bn_relu6.2}
  #allocation0 [shape = 'u32[]', space=smem, size = 0x4, offset = 0x4, fixed_abs, tag = 'smem constant byte address 0x4 - core index']
  #allocation1 [shape = 'u32[144,128]{1,0:T(1,128)}', space=vmem, size = 0x12000, scoped, tag = 'internal scratch']
  %s0 = inlined_call_operand.vmem [shape: f32[2,256,36], index: 0, kind: input, shape index: {}]
  %s1 = inlined_call_operand.vmem [shape: f32[36,128], index: 1, kind: input, shape index: {}]
  %s2 = inlined_call_operand.vmem [shape: f32[2,256,128], index: 2, kind: output, shape index: {0}]
  %s3 = inlined_call_operand.vmem [shape: f32[2,2,1,128], index: 3, kind: output, shape index: {1}]
  %s4 = inlined_call_operand.vmem [shape: f32[2,2,1,128], index: 4, kind: output, shape index: {2}]
  %5 = xla_tuple %s2, %s3, %s4
  %s6 = sld [smem:[#allocation0]]
  $region57: #{conv_bn_relu6.2} parent=0
    _
  %s8 = ssub.s32 1, %s6
  %s9 = scalar_select 0, %s8, %s6
  loop: start=0, step=1, limit=6
  $region2: #{conv_bn_relu6.2} parent=0 // loop_pre_header
    _
  $region3: #{conv_bn_relu6.2} parent=0 // loop_header
    %s11 = sphi 0, %s15
    %p12 = scmp.ge.s32.totalorder %s11, 6
    %s18 = sphi 0, %s30
    %s19 = sphi 0, %s26
    %s20 = sphi 0, %s18
    %s21 = sphi 0, %s19
    %s22 = sphi 0, %s20
    %s23 = sphi 0, %s21
    %s35 = sphi 0, %s37
    %s38 = sphi 0, %s35
    %s39 = sphi 0, %s38
    %s55 = sphi 0, %s39
    %s59 = sphi 0, %s59
    %s61 = sphi 0, %s59
    %s62 = sphi 0, %s61
    %s76 = sphi 0, %s62
    %s84 = sphi 0, %s86
    %s87 = sphi 0, %s84
    %s88 = sphi 0, %s87
    %s104 = sphi 0, %s88
    %s112 = sphi 0, %s114
    %s115 = sphi 0, %s112
    %s116 = sphi 0, %s115
    %s132 = sphi 0, %s116
    %s140 = sphi 0, %s142
    %s143 = sphi 0, %s140
    %s144 = sphi 0, %s143
    %s160 = sphi 0, %s144
  $region4: #{conv_bn_relu6.2} parent=0 // loop_header_branch
    %14 = sbr.rel (%p12) target = $region8
  $region5: #{conv_bn_relu6.2} parent=0 // loop_body
    %s16 = ssub.s32 %s11, 1
    %s17 = ssub.s32 %s11, 2
    %s24 = sadd.s32 1, %s19
    %p25 = scmp.ge.s32.totalorder %s24, 2
    %s26 = scalar_select %p25, 0, %s24
    %s27 = sadd.s32 1, %s18
    %s28 = scalar_select %p25, %s27, %s18
    %p29 = scmp.ge.s32.totalorder %s28, 2
    %s30 = scalar_select %p29, 0, %s28
    %s31 = ssub.s32 %s18, %s30
    %s32 = ssub.s32 %s19, %s26
    %s33 = sor.u32 %s31, %s32
    %p34 = scmp.eq.s32.totalorder %s33, 0
    %s36 = sadd.s32 %s35, 1
    %s37 = scalar_select %p34, %s35, %s36
    %p40 = pneg %p34
    %p41 = scmp.eq.s32.totalorder %s11, 3
    %p42 = por %p40, %p41
    %p43 = scmp.ne.s32.totalorder %s35, %s38
    %p44 = scmp.eq.s32.totalorder %s11, 0
    %p45 = por %p43, %p44
    %p46 = scmp.ne.s32.totalorder %s35, %s38
    %p47 = scmp.eq.s32.totalorder %s16, 3
    %p48 = por %p46, %p47
    %p49 = scmp.ne.s32.totalorder %s38, %s39
    %p50 = scmp.eq.s32.totalorder %s16, 0
    %p51 = por %p49, %p50
    %p52 = scmp.ne.s32.totalorder %s38, %s39
    %p53 = scmp.eq.s32.totalorder %s17, 3
    %p54 = por %p52, %p53
    %p56 = scmp.ne.s32.totalorder %s39, %s55
    %p57 = scmp.eq.s32.totalorder %s17, 0
    %p58 = por %p56, %p57
    %s60 = sadd.s32 %s59, 1
    %p63 = scmp.eq.s32.totalorder %s11, 3
    %p64 = scmp.ne.s32.totalorder %s59, %s61
    %p65 = scmp.eq.s32.totalorder %s11, 0
    %p66 = por %p64, %p65
    %p67 = scmp.ne.s32.totalorder %s59, %s61
    %p68 = scmp.eq.s32.totalorder %s16, 3
    %p69 = por %p67, %p68
    %p70 = scmp.ne.s32.totalorder %s61, %s62
    %p71 = scmp.eq.s32.totalorder %s16, 0
    %p72 = por %p70, %p71
    %p73 = scmp.ne.s32.totalorder %s61, %s62
    %p74 = scmp.eq.s32.totalorder %s17, 3
    %p75 = por %p73, %p74
    %p77 = scmp.ne.s32.totalorder %s62, %s76
    %p78 = scmp.eq.s32.totalorder %s17, 0
    %p79 = por %p77, %p78
    %s80 = ssub.s32 %s18, %s30
    %s81 = ssub.s32 %s19, %s26
    %s82 = sor.u32 %s80, %s81
    %p83 = scmp.eq.s32.totalorder %s82, 0
    %s85 = sadd.s32 %s84, 1
    %s86 = scalar_select %p83, %s84, %s85
    %p89 = pneg %p83
    %p90 = scmp.eq.s32.totalorder %s11, 3
    %p91 = por %p89, %p90
    %p92 = scmp.ne.s32.totalorder %s84, %s87
    %p93 = scmp.eq.s32.totalorder %s11, 0
    %p94 = por %p92, %p93
    %p95 = scmp.ne.s32.totalorder %s84, %s87
    %p96 = scmp.eq.s32.totalorder %s16, 3
    %p97 = por %p95, %p96
    %p98 = scmp.ne.s32.totalorder %s87, %s88
    %p99 = scmp.eq.s32.totalorder %s16, 0
    %p100 = por %p98, %p99
    %p101 = scmp.ne.s32.totalorder %s87, %s88
    %p102 = scmp.eq.s32.totalorder %s17, 3
    %p103 = por %p101, %p102
    %p105 = scmp.ne.s32.totalorder %s88, %s104
    %p106 = scmp.eq.s32.totalorder %s17, 0
    %p107 = por %p105, %p106
    %s108 = ssub.s32 %s18, %s30
    %s109 = ssub.s32 %s19, %s26
    %s110 = sor.u32 %s108, %s109
    %p111 = scmp.eq.s32.totalorder %s110, 0
    %s113 = sadd.s32 %s112, 1
    %s114 = scalar_select %p111, %s112, %s113
    %p117 = pneg %p111
    %p118 = scmp.eq.s32.totalorder %s11, 3
    %p119 = por %p117, %p118
    %p120 = scmp.ne.s32.totalorder %s112, %s115
    %p121 = scmp.eq.s32.totalorder %s11, 0
    %p122 = por %p120, %p121
    %p123 = scmp.ne.s32.totalorder %s112, %s115
    %p124 = scmp.eq.s32.totalorder %s16, 3
    %p125 = por %p123, %p124
    %p126 = scmp.ne.s32.totalorder %s115, %s116
    %p127 = scmp.eq.s32.totalorder %s16, 0
    %p128 = por %p126, %p127
    %p129 = scmp.ne.s32.totalorder %s115, %s116
    %p130 = scmp.eq.s32.totalorder %s17, 3
    %p131 = por %p129, %p130
    %p133 = scmp.ne.s32.totalorder %s116, %s132
    %p134 = scmp.eq.s32.totalorder %s17, 0
    %p135 = por %p133, %p134
    %s136 = ssub.s32 %s18, %s30
    %s137 = ssub.s32 %s19, %s26
    %s138 = sor.u32 %s136, %s137
    %p139 = scmp.eq.s32.totalorder %s138, 0
    %s141 = sadd.s32 %s140, 1
    %s142 = scalar_select %p139, %s140, %s141
    %p145 = pneg %p139
    %p146 = scmp.eq.s32.totalorder %s11, 3
    %p147 = por %p145, %p146
    %p148 = scmp.ne.s32.totalorder %s140, %s143
    %p149 = scmp.eq.s32.totalorder %s11, 0
    %p150 = por %p148, %p149
    %p151 = scmp.ne.s32.totalorder %s140, %s143
    %p152 = scmp.eq.s32.totalorder %s16, 3
    %p153 = por %p151, %p152
    %p154 = scmp.ne.s32.totalorder %s143, %s144
    %p155 = scmp.eq.s32.totalorder %s16, 0
    %p156 = por %p154, %p155
    %p157 = scmp.ne.s32.totalorder %s143, %s144
    %p158 = scmp.eq.s32.totalorder %s17, 3
    %p159 = por %p157, %p158
    %p161 = scmp.ne.s32.totalorder %s144, %s160
    %p162 = scmp.eq.s32.totalorder %s17, 0
    %p163 = por %p161, %p162
    %p164 = scmp.le.s32.totalorder 1, %s11
    %p165 = scmp.lt.s32.totalorder %s11, 5
    %p166 = pnand %p164, %p165
    %p167 = pneg %p166
    // Predicated region
    $region9: #{conv_bn_relu6.2} parent=5 // pred_check
      _
    $region10: #{conv_bn_relu6.2} parent=5 // pred_check_branch
      %169 = sbr.rel (%p166) target = $region12
    $region11: #{conv_bn_relu6.2} parent=5 // pred_region
      %s170 = ssub.s32 %s11, 1
      // Predicated region
      $region13: #{conv_bn_relu6.2} parent=11 // pred_check
        %p171 = pneg %p72
      $region14: #{conv_bn_relu6.2} parent=11 // pred_check_branch
        %173 = sbr.rel (%p171) target = $region16
      $region15: #{conv_bn_relu6.2} parent=11 // pred_region
        _
      $region16: #{conv_bn_relu6.2} parent=11 // pred_fallthru
        _
    $region12: #{conv_bn_relu6.2} parent=5 // pred_fallthru
      _
    %p174 = scmp.lt.s32.totalorder %s11, 4
    // Predicated region
    $region17: #{conv_bn_relu6.2} parent=5 // pred_check
      %p175 = pneg %p174
    $region18: #{conv_bn_relu6.2} parent=5 // pred_check_branch
      %177 = sbr.rel (%p175) target = $region20
    $region19: #{conv_bn_relu6.2} parent=5 // pred_region
      // Predicated region
      $region21: #{conv_bn_relu6.2} parent=19 // pred_check
        %p178 = pneg %p45
      $region22: #{conv_bn_relu6.2} parent=19 // pred_check_branch
        %180 = sbr.rel (%p178) target = $region24
      $region23: #{conv_bn_relu6.2} parent=19 // pred_region
        %s181 = smul.u32 16, %s19
        %p182 = scmp.lt.s32.totalorder %s18, 1
        %s183 = scalar_select %p182, %s18, 1
        %p184 = scmp.lt.s32.totalorder %s181, 31
        %s185 = scalar_select %p184, %s181, 31
        %s186 = smul.addr %s183, 32
        %s187 = sadd.s32 %s185, %s186
        %s188 = smul.addr %s187, 8
        %s189 = scalar_lea.vmem %s0, %s188
        %s190 = smul.u32 16, %s19
      $region24: #{conv_bn_relu6.2} parent=19 // pred_fallthru
        _
    $region20: #{conv_bn_relu6.2} parent=5 // pred_fallthru
      _
    %p191 = scmp.le.s32.totalorder 1, %s11
    %p192 = scmp.lt.s32.totalorder %s11, 5
    %p193 = pnand %p191, %p192
    %p194 = pneg %p193
    // Predicated region
    $region25: #{conv_bn_relu6.2} parent=5 // pred_check
      _
    $region26: #{conv_bn_relu6.2} parent=5 // pred_check_branch
      %196 = sbr.rel (%p193) target = $region28
    $region27: #{conv_bn_relu6.2} parent=5 // pred_region
      %s197 = ssub.s32 %s11, 1
      %s198 = smul.u32 16, %s21
      %p199 = scmp.lt.s32.totalorder %s20, 1
      %s200 = scalar_select %p199, %s20, 1
      %p201 = scmp.lt.s32.totalorder %s198, 31
      %s202 = scalar_select %p201, %s198, 31
      %s203 = smul.addr %s200, 32
      %s204 = sadd.s32 %s202, %s203
      %s205 = smul.addr %s204, 8
      %s206 = scalar_lea.vmem %s0, %s205
      %p207 = pneg %p51
      %p208 = pneg %p48
      %p209 = pneg %p72
      %p210 = pneg %p69
      %p211 = pneg %p100
      %p212 = pneg %p97
      %s213 = smul.u32 16, %s21
      %p214 = scmp.lt.s32.totalorder %s20, 1
      %s215 = scalar_select %p214, %s20, 1
      %p216 = scmp.lt.s32.totalorder %s213, 31
      %s217 = scalar_select %p216, %s213, 31
      %s218 = smul.addr %s215, 32
      %s219 = sadd.s32 %s217, %s218
      %s220 = smul.addr %s219, 8
      %s221 = scalar_lea.vmem %s2, %s220
      %p222 = pneg %p128
      %p223 = pneg %p125
      %p224 = scmp.lt.s32.totalorder %s20, 1
      %s225 = scalar_select %p224, %s20, 1
      %p226 = scmp.lt.s32.totalorder %s21, 1
      %s227 = scalar_select %p226, %s21, 1
      %s228 = smul.addr %s225, 2
      %s229 = sadd.s32 %s227, %s228
      %s230 = scalar_lea.vmem %s3, %s229
      %p231 = pneg %p156
      %p232 = pneg %p153
      %p233 = scmp.lt.s32.totalorder %s20, 1
      %s234 = scalar_select %p233, %s20, 1
      %p235 = scmp.lt.s32.totalorder %s21, 1
      %s236 = scalar_select %p235, %s21, 1
      %s237 = smul.addr %s234, 2
      %s238 = sadd.s32 %s236, %s237
      %s239 = scalar_lea.vmem %s4, %s238
      %s240 = smul.u32 16, %s21
      %p241 = scmp.lt.s32.totalorder %s20, 1
      %s242 = scalar_select %p241, %s20, 1
      %p243 = scmp.lt.s32.totalorder %s240, 31
      %s244 = scalar_select %p243, %s240, 31
      %s245 = smul.addr %s242, 32
      %s246 = sadd.s32 %s244, %s245
      %s247 = smul.addr %s246, 8
      %s248 = scalar_lea.vmem %s0, %s247
      %s249 = smul.u32 16, %s21
      %s250 = smul.u32 16, %s21
      %p251 = scmp.lt.s32.totalorder %s20, 1
      %s252 = scalar_select %p251, %s20, 1
      %p253 = scmp.lt.s32.totalorder %s250, 31
      %s254 = scalar_select %p253, %s250, 31
      %s255 = smul.addr %s252, 32
      %s256 = sadd.s32 %s254, %s255
      %s257 = smul.addr %s256, 8
      %s258 = scalar_lea.vmem %s2, %s257
      %s259 = smul.u32 16, %s21
      %p260 = scmp.lt.s32.totalorder %s20, 1
      %s261 = scalar_select %p260, %s20, 1
      %p262 = scmp.lt.s32.totalorder %s21, 1
      %s263 = scalar_select %p262, %s21, 1
      %s264 = smul.addr %s261, 2
      %s265 = sadd.s32 %s263, %s264
      %s266 = scalar_lea.vmem %s3, %s265
      %p267 = scmp.lt.s32.totalorder %s20, 1
      %s268 = scalar_select %p267, %s20, 1
      %p269 = scmp.lt.s32.totalorder %s21, 1
      %s270 = scalar_select %p269, %s21, 1
      %s271 = smul.addr %s268, 2
      %s272 = sadd.s32 %s270, %s271
      %s273 = scalar_lea.vmem %s4, %s272
      %v274 = vld [vmem:[%s248] sm:$0xff]
      %v275 = vld [vmem:[%s248 + $0x8] sm:$0xff]
      %v276 = vld [vmem:[%s248 + $0x10] sm:$0xff]
      %v277 = vld [vmem:[%s248 + $0x18] sm:$0xff]
      %v278 = vld [vmem:[%s248 + $0x20] sm:$0xff]
      %v279 = vld [vmem:[%s248 + $0x28] sm:$0xff]
      %v280 = vld [vmem:[%s248 + $0x30] sm:$0xff]
      %v281 = vld [vmem:[%s248 + $0x38] sm:$0xff]
      %v282 = vld [vmem:[%s248 + $0x40] sm:$0xff]
      %v283 = vld [vmem:[%s248 + $0x48] sm:$0xff]
      %v284 = vld [vmem:[%s248 + $0x50] sm:$0xff]
      %v285 = vld [vmem:[%s248 + $0x58] sm:$0xff]
      %v286 = vld [vmem:[%s248 + $0x60] sm:$0xff]
      %v287 = vld [vmem:[%s248 + $0x68] sm:$0xff]
      %v288 = vld [vmem:[%s248 + $0x70] sm:$0xff]
      %v289 = vld [vmem:[%s248 + $0x78] sm:$0xff]
      %v290 = vld [vmem:[%s1] sm:$0xff]
      %v291 = vld [vmem:[%s1 + $0x8] sm:$0xff]
      %v292 = vld [vmem:[%s1 + $0x10] sm:$0xff]
      %v293 = vld [vmem:[%s1 + $0x18] sm:$0xff]
      %v294 = vld [vmem:[%s1 + $0x20] sm:$0xf]
      %vm295 = vcmask 293888
      %v297 = vsel %vm295, %v274, 0
      %v300 = vsel %vm295, %v275, 0
      %v303 = vsel %vm295, %v276, 0
      %v306 = vsel %vm295, %v277, 0
      %v309 = vsel %vm295, %v278, 0
      %v312 = vsel %vm295, %v279, 0
      %v315 = vsel %vm295, %v280, 0
      %v318 = vsel %vm295, %v281, 0
      %v321 = vsel %vm295, %v282, 0
      %v324 = vsel %vm295, %v283, 0
      %v327 = vsel %vm295, %v284, 0
      %v330 = vsel %vm295, %v285, 0
      %v333 = vsel %vm295, %v286, 0
      %v336 = vsel %vm295, %v287, 0
      %v339 = vsel %vm295, %v288, 0
      %v342 = vsel %vm295, %v289, 0
      %vm344 = vcmask 1043456
      %v346 = vsel %vm344, %v294, 0
      %348 = vmatprep.subr.mxu0 0.0
      %349 = vmatpush1.msra.mxu0 %v290
      %350 = vmatprep.subr.mxu0 0.0
      %351 = vmatpush1.msra.mxu0 %v291
      %352 = vmatprep.subr.mxu0 0.0
      %353 = vmatpush1.msra.mxu0 %v292
      %354 = vmatprep.subr.mxu0 0.0
      %355 = vmatpush1.msra.mxu0 %v293
      %356 = vmatprep.subr.mxu0 0.0
      %357 = vmatpush1.msra.mxu0 %v346
      %358 = vmatprep.subr.mxu0 0.0
      %359 = vmatpush1.msra.mxu0 0.0
      %360 = vmatprep.subr.mxu0 0.0
      %361 = vmatpush1.msra.mxu0 0.0
      %362 = vmatprep.subr.mxu0 0.0
      %363 = vmatpush1.msra.mxu0 0.0
      %364 = vmatprep.subr.mxu0 0.0
      %365 = vmatpush1.msra.mxu0 0.0
      %366 = vmatprep.subr.mxu0 0.0
      %367 = vmatpush1.msra.mxu0 0.0
      %368 = vmatprep.subr.mxu0 0.0
      %369 = vmatpush1.msra.mxu0 0.0
      %370 = vmatprep.subr.mxu0 0.0
      %371 = vmatpush1.msra.mxu0 0.0
      %372 = vmatprep.subr.mxu0 0.0
      %373 = vmatpush1.msra.mxu0 0.0
      %374 = vmatprep.subr.mxu0 0.0
      %375 = vmatpush1.msra.mxu0 0.0
      %376 = vmatprep.subr.mxu0 0.0
      %377 = vmatpush1.msra.mxu0 0.0
      %378 = vmatprep.subr.mxu0 0.0
      %379 = vmatpush1.msra.mxu0 0.0
      %380 = vmatprep.subr.mxu0 0.0
      %381 = vmatpush1.msra.mxu0 0.0
      %382 = vmatprep.subr.mxu0 0.0
      %383 = vmatpush1.msra.mxu0 0.0
      %384 = vmatprep.subr.mxu0 0.0
      %385 = vmatpush1.msra.mxu0 0.0
      %386 = vmatprep.subr.mxu0 0.0
      %387 = vmatpush1.msra.mxu0 0.0
      %388 = vmatprep.subr.mxu0 0.0
      %389 = vmatpush1.msra.mxu0 0.0
      %390 = vmatprep.subr.mxu0 0.0
      %391 = vmatpush1.msra.mxu0 0.0
      %392 = vmatprep.subr.mxu0 0.0
      %393 = vmatpush1.msra.mxu0 0.0
      %394 = vmatprep.subr.mxu0 0.0
      %395 = vmatpush1.msra.mxu0 0.0
      %396 = vmatprep.subr.mxu0 0.0
      %397 = vmatpush1.msra.mxu0 0.0
      %398 = vmatprep.subr.mxu0 0.0
      %399 = vmatpush1.msra.mxu0 0.0
      %400 = vmatprep.subr.mxu0 0.0
      %401 = vmatpush1.msra.mxu0 0.0
      %402 = vmatprep.subr.mxu0 0.0
      %403 = vmatpush1.msra.mxu0 0.0
      %404 = vmatprep.subr.mxu0 0.0
      %405 = vmatpush1.msra.mxu0 0.0
      %406 = vmatprep.subr.mxu0 0.0
      %407 = vmatpush1.msra.mxu0 0.0
      %408 = vmatprep.subr.mxu0 0.0
      %409 = vmatpush1.msra.mxu0 0.0
      %410 = vmatprep.subr.mxu0 0.0
      %411 = vmatpush1.msra.mxu0 0.0
      %412 = vmatprep.mubr.f32.mxu0 0.0
      %413 = vmatmul.mubr.f32.gmra.mrb[0].mxu0 %v297
      %v414 = vpop.f32.mrb[0].mxu0
      %v415 = vadd.f32 0.0, %v414
      %v416 = vpop.f32.mrb[0].mxu0
      %417 = vmatprep.mubr.f32.mxu0 0.0
      %418 = vmatmul.mubr.f32.gmra.mrb[0].mxu0 %v300
      %v419 = vpop.f32.mrb[0].mxu0
      %v420 = vadd.f32 0.0, %v419
      %v421 = vpop.f32.mrb[0].mxu0
      %422 = vmatprep.mubr.f32.mxu0 0.0
      %423 = vmatmul.mubr.f32.gmra.mrb[0].mxu0 %v303
      %v424 = vpop.f32.mrb[0].mxu0
      %v425 = vadd.f32 0.0, %v424
      %v426 = vpop.f32.mrb[0].mxu0
      %427 = vmatprep.mubr.f32.mxu0 0.0
      %428 = vmatmul.mubr.f32.gmra.mrb[0].mxu0 %v306
      %v429 = vpop.f32.mrb[0].mxu0
      %v430 = vadd.f32 0.0, %v429
      %v431 = vpop.f32.mrb[0].mxu0
      %432 = vmatprep.mubr.f32.mxu0 0.0
      %433 = vmatmul.mubr.f32.gmra.mrb[0].mxu0 %v309
      %v434 = vpop.f32.mrb[0].mxu0
      %v435 = vadd.f32 0.0, %v434
      %v436 = vpop.f32.mrb[0].mxu0
      %437 = vmatprep.mubr.f32.mxu0 0.0
      %438 = vmatmul.mubr.f32.gmra.mrb[0].mxu0 %v312
      %v439 = vpop.f32.mrb[0].mxu0
      %v440 = vadd.f32 0.0, %v439
      %v441 = vpop.f32.mrb[0].mxu0
      %442 = vmatprep.mubr.f32.mxu0 0.0
      %443 = vmatmul.mubr.f32.gmra.mrb[0].mxu0 %v315
      %v444 = vpop.f32.mrb[0].mxu0
      %v445 = vadd.f32 0.0, %v444
      %v446 = vpop.f32.mrb[0].mxu0
      %447 = vmatprep.mubr.f32.mxu0 0.0
      %448 = vmatmul.mubr.f32.gmra.mrb[0].mxu0 %v318
      %v449 = vpop.f32.mrb[0].mxu0
      %v450 = vadd.f32 0.0, %v449
      %v451 = vpop.f32.mrb[0].mxu0
      %452 = vmatprep.mubr.f32.mxu0 0.0
      %453 = vmatmul.mubr.f32.gmra.mrb[0].mxu0 %v321
      %v454 = vpop.f32.mrb[0].mxu0
      %v455 = vadd.f32 0.0, %v454
      %v456 = vpop.f32.mrb[0].mxu0
      %457 = vmatprep.mubr.f32.mxu0 0.0
      %458 = vmatmul.mubr.f32.gmra.mrb[0].mxu0 %v324
      %v459 = vpop.f32.mrb[0].mxu0
      %v460 = vadd.f32 0.0, %v459
      %v461 = vpop.f32.mrb[0].mxu0
      %462 = vmatprep.mubr.f32.mxu0 0.0
      %463 = vmatmul.mubr.f32.gmra.mrb[0].mxu0 %v327
      %v464 = vpop.f32.mrb[0].mxu0
      %v465 = vadd.f32 0.0, %v464
      %v466 = vpop.f32.mrb[0].mxu0
      %467 = vmatprep.mubr.f32.mxu0 0.0
      %468 = vmatmul.mubr.f32.gmra.mrb[0].mxu0 %v330
      %v469 = vpop.f32.mrb[0].mxu0
      %v470 = vadd.f32 0.0, %v469
      %v471 = vpop.f32.mrb[0].mxu0
      %472 = vmatprep.mubr.f32.mxu0 0.0
      %473 = vmatmul.mubr.f32.gmra.mrb[0].mxu0 %v333
      %v474 = vpop.f32.mrb[0].mxu0
      %v475 = vadd.f32 0.0, %v474
      %v476 = vpop.f32.mrb[0].mxu0
      %477 = vmatprep.mubr.f32.mxu0 0.0
      %478 = vmatmul.mubr.f32.gmra.mrb[0].mxu0 %v336
      %v479 = vpop.f32.mrb[0].mxu0
      %v480 = vadd.f32 0.0, %v479
      %v481 = vpop.f32.mrb[0].mxu0
      %482 = vmatprep.mubr.f32.mxu0 0.0
      %483 = vmatmul.mubr.f32.gmra.mrb[0].mxu0 %v339
      %v484 = vpop.f32.mrb[0].mxu0
      %v485 = vadd.f32 0.0, %v484
      %v486 = vpop.f32.mrb[0].mxu0
      %487 = vmatprep.mubr.f32.mxu0 0.0
      %488 = vmatmul.mubr.f32.gmra.mrb[0].mxu0 %v342
      %v489 = vpop.f32.mrb[0].mxu0
      %v490 = vadd.f32 0.0, %v489
      %v491 = vpop.f32.mrb[0].mxu0
      %492 = vdwg.mxu0
      %493 = vst [vmem:[%s258] sm:$0xff] %v415
      %494 = vst [vmem:[%s258 + $0x8] sm:$0xff] %v420
      %495 = vst [vmem:[%s258 + $0x10] sm:$0xff] %v425
      %496 = vst [vmem:[%s258 + $0x18] sm:$0xff] %v430
      %497 = vst [vmem:[%s258 + $0x20] sm:$0xff] %v435
      %498 = vst [vmem:[%s258 + $0x28] sm:$0xff] %v440
      %499 = vst [vmem:[%s258 + $0x30] sm:$0xff] %v445
      %500 = vst [vmem:[%s258 + $0x38] sm:$0xff] %v450
      %501 = vst [vmem:[%s258 + $0x40] sm:$0xff] %v455
      %502 = vst [vmem:[%s258 + $0x48] sm:$0xff] %v460
      %503 = vst [vmem:[%s258 + $0x50] sm:$0xff] %v465
      %504 = vst [vmem:[%s258 + $0x58] sm:$0xff] %v470
      %505 = vst [vmem:[%s258 + $0x60] sm:$0xff] %v475
      %506 = vst [vmem:[%s258 + $0x68] sm:$0xff] %v480
      %507 = vst [vmem:[%s258 + $0x70] sm:$0xff] %v485
      %508 = vst [vmem:[%s258 + $0x78] sm:$0xff] %v490
      %v509 = vadd.f32 %v415, %v420
      %v510 = vadd.f32 %v509, %v425
      %v511 = vadd.f32 %v510, %v430
      %v512 = vadd.f32 %v511, %v435
      %v513 = vadd.f32 %v512, %v440
      %v514 = vadd.f32 %v513, %v445
      %v515 = vadd.f32 %v514, %v450
      %v516 = vadd.f32 %v515, %v455
      %v517 = vadd.f32 %v516, %v460
      %v518 = vadd.f32 %v517, %v465
      %v519 = vadd.f32 %v518, %v470
      %v520 = vadd.f32 %v519, %v475
      %v521 = vadd.f32 %v520, %v480
      %v522 = vadd.f32 %v521, %v485
      %v523 = vadd.f32 %v522, %v490
      %v524 = vrot.slane %v523, 4
      %v525 = vadd.f32 %v523, %v524
      %v526 = vrot.slane %v525, 2
      %v527 = vadd.f32 %v525, %v526
      %v528 = vrot.slane %v527, 1
      %v529 = vadd.f32 %v527, %v528
      %530 = vst [vmem:[%s266] sm:$0x1] %v529
      %v531 = vmul.f32 %v415, %v415
      %v532 = vmul.f32 %v420, %v420
      %v533 = vmul.f32 %v425, %v425
      %v534 = vmul.f32 %v430, %v430
      %v535 = vmul.f32 %v435, %v435
      %v536 = vmul.f32 %v440, %v440
      %v537 = vmul.f32 %v445, %v445
      %v538 = vmul.f32 %v450, %v450
      %v539 = vmul.f32 %v455, %v455
      %v540 = vmul.f32 %v460, %v460
      %v541 = vmul.f32 %v465, %v465
      %v542 = vmul.f32 %v470, %v470
      %v543 = vmul.f32 %v475, %v475
      %v544 = vmul.f32 %v480, %v480
      %v545 = vmul.f32 %v485, %v485
      %v546 = vmul.f32 %v490, %v490
      %v547 = vadd.f32 %v531, %v532
      %v548 = vadd.f32 %v547, %v533
      %v549 = vadd.f32 %v548, %v534
      %v550 = vadd.f32 %v549, %v535
      %v551 = vadd.f32 %v550, %v536
      %v552 = vadd.f32 %v551, %v537
      %v553 = vadd.f32 %v552, %v538
      %v554 = vadd.f32 %v553, %v539
      %v555 = vadd.f32 %v554, %v540
      %v556 = vadd.f32 %v555, %v541
      %v557 = vadd.f32 %v556, %v542
      %v558 = vadd.f32 %v557, %v543
      %v559 = vadd.f32 %v558, %v544
      %v560 = vadd.f32 %v559, %v545
      %v561 = vadd.f32 %v560, %v546
      %v562 = vrot.slane %v561, 4
      %v563 = vadd.f32 %v561, %v562
      %v564 = vrot.slane %v563, 2
      %v565 = vadd.f32 %v563, %v564
      %v566 = vrot.slane %v565, 1
      %v567 = vadd.f32 %v565, %v566
      %568 = vst [vmem:[%s273] sm:$0x1] %v567
      %s569 = smul.u32 16, %s21
      %p570 = scmp.lt.s32.totalorder %s20, 1
      %s571 = scalar_select %p570, %s20, 1
      %p572 = scmp.lt.s32.totalorder %s569, 31
      %s573 = scalar_select %p572, %s569, 31
      %s574 = smul.addr %s571, 32
      %s575 = sadd.s32 %s573, %s574
      %s576 = smul.addr %s575, 8
      %s577 = scalar_lea.vmem %s2, %s576
      %p578 = scmp.lt.s32.totalorder %s20, 1
      %s579 = scalar_select %p578, %s20, 1
      %p580 = scmp.lt.s32.totalorder %s21, 1
      %s581 = scalar_select %p580, %s21, 1
      %s582 = smul.addr %s579, 2
      %s583 = sadd.s32 %s581, %s582
      %s584 = scalar_lea.vmem %s3, %s583
      %p585 = scmp.lt.s32.totalorder %s20, 1
      %s586 = scalar_select %p585, %s20, 1
      %p587 = scmp.lt.s32.totalorder %s21, 1
      %s588 = scalar_select %p587, %s21, 1
      %s589 = smul.addr %s586, 2
      %s590 = sadd.s32 %s588, %s589
      %s591 = scalar_lea.vmem %s4, %s590
      // Predicated region
      $region29: #{conv_bn_relu6.2} parent=27 // pred_check
        %p592 = pneg %p97
      $region30: #{conv_bn_relu6.2} parent=27 // pred_check_branch
        %594 = sbr.rel (%p592) target = $region32
      $region31: #{conv_bn_relu6.2} parent=27 // pred_region
        %s595 = smul.u32 16, %s21
      $region32: #{conv_bn_relu6.2} parent=27 // pred_fallthru
        _
      // Predicated region
      $region33: #{conv_bn_relu6.2} parent=27 // pred_check
        %p596 = pneg %p125
      $region34: #{conv_bn_relu6.2} parent=27 // pred_check_branch
        %598 = sbr.rel (%p596) target = $region36
      $region35: #{conv_bn_relu6.2} parent=27 // pred_region
        _
      $region36: #{conv_bn_relu6.2} parent=27 // pred_fallthru
        _
      // Predicated region
      $region37: #{conv_bn_relu6.2} parent=27 // pred_check
        %p599 = pneg %p153
      $region38: #{conv_bn_relu6.2} parent=27 // pred_check_branch
        %601 = sbr.rel (%p599) target = $region40
      $region39: #{conv_bn_relu6.2} parent=27 // pred_region
        _
      $region40: #{conv_bn_relu6.2} parent=27 // pred_fallthru
        _
    $region28: #{conv_bn_relu6.2} parent=5 // pred_fallthru
      _
    %p602 = scmp.le.s32.totalorder 2, %s11
    // Predicated region
    $region41: #{conv_bn_relu6.2} parent=5 // pred_check
      %p603 = pneg %p602
    $region42: #{conv_bn_relu6.2} parent=5 // pred_check_branch
      %605 = sbr.rel (%p603) target = $region44
    $region43: #{conv_bn_relu6.2} parent=5 // pred_region
      %s606 = ssub.s32 %s11, 2
      // Predicated region
      $region45: #{conv_bn_relu6.2} parent=43 // pred_check
        %p607 = pneg %p103
      $region46: #{conv_bn_relu6.2} parent=43 // pred_check_branch
        %609 = sbr.rel (%p607) target = $region48
      $region47: #{conv_bn_relu6.2} parent=43 // pred_region
        %s610 = smul.u32 16, %s23
        %p611 = scmp.lt.s32.totalorder %s22, 1
        %s612 = scalar_select %p611, %s22, 1
        %p613 = scmp.lt.s32.totalorder %s610, 31
        %s614 = scalar_select %p613, %s610, 31
        %s615 = smul.addr %s612, 32
        %s616 = sadd.s32 %s614, %s615
        %s617 = smul.addr %s616, 8
        %s618 = scalar_lea.vmem %s2, %s617
      $region48: #{conv_bn_relu6.2} parent=43 // pred_fallthru
        _
      // Predicated region
      $region49: #{conv_bn_relu6.2} parent=43 // pred_check
        %p619 = pneg %p131
      $region50: #{conv_bn_relu6.2} parent=43 // pred_check_branch
        %621 = sbr.rel (%p619) target = $region52
      $region51: #{conv_bn_relu6.2} parent=43 // pred_region
        %p622 = scmp.lt.s32.totalorder %s22, 1
        %s623 = scalar_select %p622, %s22, 1
        %p624 = scmp.lt.s32.totalorder %s23, 1
        %s625 = scalar_select %p624, %s23, 1
        %s626 = smul.addr %s623, 2
        %s627 = sadd.s32 %s625, %s626
        %s628 = scalar_lea.vmem %s3, %s627
      $region52: #{conv_bn_relu6.2} parent=43 // pred_fallthru
        _
      // Predicated region
      $region53: #{conv_bn_relu6.2} parent=43 // pred_check
        %p629 = pneg %p159
      $region54: #{conv_bn_relu6.2} parent=43 // pred_check_branch
        %631 = sbr.rel (%p629) target = $region56
      $region55: #{conv_bn_relu6.2} parent=43 // pred_region
        %p632 = scmp.lt.s32.totalorder %s22, 1
        %s633 = scalar_select %p632, %s22, 1
        %p634 = scmp.lt.s32.totalorder %s23, 1
        %s635 = scalar_select %p634, %s23, 1
        %s636 = smul.addr %s633, 2
        %s637 = sadd.s32 %s635, %s636
        %s638 = scalar_lea.vmem %s4, %s637
      $region56: #{conv_bn_relu6.2} parent=43 // pred_fallthru
        _
    $region44: #{conv_bn_relu6.2} parent=5 // pred_fallthru
      _
  $region6: #{conv_bn_relu6.2} parent=0 // loop_footer
    %s15 = sadd.s32 1, %s11
  $region7: #{conv_bn_relu6.2} parent=0 // loop_footer_branch
    %10 = sbr.rel target = $region3
  $region8: #{conv_bn_relu6.2} parent=0 // loop_exit
    _

</llo_original>
